<compile_context>
chip_gen: v7x
topology: tpu7x:2x2x1
jax: 0.10.0
libtpu: 0.0.40
codegen_flags: <defaults>
</compile_context>

<pallas_src>
import functools

import jax
import jax.numpy as jnp
from jax.experimental import pallas as pl
from jax.experimental.pallas import tpu as pltpu

LANE = 128
# 2 inputs x 2 pipeline buffers of (row_tile, 128) must fit this budget.
MAX_PIPELINE_BYTES = 16 * 1024 * 1024  # -> 8192 rows f32, 16384 rows bf16


def _num_tensorcores():
    """1 on single-TC chips (v5e/v6e), 2 on megacore/v7x. Safe fallback: 2."""
    try:
        dev = jax.devices()[0]
        n = getattr(dev, "num_cores", None)
        if isinstance(n, int) and n > 0:
            return max(1, min(2, n))
        kind = str(getattr(dev, "device_kind", "")).lower()
        if "lite" in kind or "v5e" in kind or "v6e" in kind:
            return 1
    except Exception:
        pass
    return 2


def _focal_loss_kernel(pred_ref, true_ref, out_ref, *,
                       row_tile, blocks_per_core, num_blocks, rem_last,
                       gamma, alpha):
    c = pl.program_id(0)   # "core" / parallel axis
    i = pl.program_id(1)   # reduction axis (arbitrary)

    @pl.when(i == 0)
    def _():
        out_ref[...] = jnp.zeros_like(out_ref)

    block_idx = c * blocks_per_core + i

    # Constants folded at trace time (no in-kernel constant arithmetic).
    af_c0 = float(1.0 - alpha)
    af_c1 = float(2.0 * alpha - 1.0)

    def block_loss():
        x = pred_ref[...].astype(jnp.float32)
        t = true_ref[...].astype(jnp.float32)
        # One exp / log1p / sqrt per element (EUP). The divide for sigmoid is
        # an approx vrcp (EUP) refined with one Newton step (2 mul + 1 sub on
        # VALU) instead of a full VALU divide sequence.
        e = jnp.exp(-jnp.abs(x))
        d = 1.0 + e
        r = pl.reciprocal(d, approx=True)
        inv = r * (2.0 - d * r)                         # ~f32-accurate 1/(1+e)
        bce = jnp.maximum(x, 0.0) - x * t + jnp.log1p(e)
        pred_prob = jnp.where(x >= 0.0, inv, e * inv)   # sigmoid(x), stable
        # m = 1 - p_t = p + t*(1 - 2p)  (p_t never materialized)
        m = pred_prob + t * (1.0 - 2.0 * pred_prob)
        alpha_factor = af_c0 + t * af_c1
        if gamma == 1.5:
            modulating = m * jnp.sqrt(m)                # m**1.5 without pow
        elif gamma == 2.0:
            modulating = m * m
        elif gamma == 1.0:
            modulating = m
        else:
            modulating = m ** gamma
        return bce * alpha_factor * modulating

    def accumulate(loss):
        # Keep the accumulator vreg-shaped (8,128); the full cross-lane
        # reduction happens once in the wrapper.
        out_ref[...] += jnp.sum(loss.reshape(row_tile // 8, 8, LANE), axis=0)

    if rem_last == row_tile:
        # Every real block is full: no per-element masking anywhere; only skip
        # grid-overhang blocks (re-read of the clamped last block).
        @pl.when(block_idx < num_blocks)
        def _():
            accumulate(block_loss())
    else:
        # Interior blocks: fully unmasked accumulation.
        @pl.when(block_idx < num_blocks - 1)
        def _():
            accumulate(block_loss())

        # Last block: mask the (static) tail rows; OOB rows read stale VMEM
        # which is discarded by the select.
        @pl.when(block_idx == num_blocks - 1)
        def _():
            row_ids = jax.lax.broadcasted_iota(jnp.int32, (row_tile, LANE), 0)
            accumulate(jnp.where(row_ids < rem_last, block_loss(), 0.0))


def _focal_sum_jnp(x, t, gamma, alpha):
    """Sum of focal loss over a tiny (<128 elem) remainder, pure JAX."""
    x = x.astype(jnp.float32)
    t = t.astype(jnp.float32)
    bce = jnp.maximum(x, 0.0) - x * t + jnp.log1p(jnp.exp(-jnp.abs(x)))
    p = jax.nn.sigmoid(x)
    m = p + t * (1.0 - 2.0 * p)
    alpha_factor = (1.0 - alpha) + t * (2.0 * alpha - 1.0)
    mod = m * jnp.sqrt(m) if gamma == 1.5 else m ** gamma
    return jnp.sum(bce * alpha_factor * mod)


def focal_loss(pred, true, gamma=1.5, alpha=0.25, reduction='mean'):
    """FocalLoss(BCEWithLogitsLoss, gamma=1.5, alpha=0.25) forward pass."""
    assert pred.shape == true.shape
    if reduction not in ('mean', 'sum'):
        # TODO(synk): reduction='none' (elementwise output) not implemented here.
        raise NotImplementedError("only 'mean' and 'sum' reductions are supported")

    n_total = pred.size
    assert n_total > 0
    pred_f = pred.reshape(-1)   # native dtype: bf16 stays bf16 (half HBM bytes)
    true_f = true.reshape(-1)

    rows = n_total // LANE
    n_main = rows * LANE
    n_tail = n_total - n_main

    total = jnp.zeros((), jnp.float32)

    if rows > 0:
        if n_tail:
            # Aligned-prefix slice instead of a whole-array jnp.pad copy; the
            # < 128-element remainder is handled below in plain JAX.
            pred2d = pred_f[:n_main].reshape(rows, LANE)
            true2d = true_f[:n_main].reshape(rows, LANE)
        else:
            pred2d = pred_f.reshape(rows, LANE)       # free bitcast reshapes
            true2d = true_f.reshape(rows, LANE)

        num_cores = _num_tensorcores()

        itemsize_sum = pred.dtype.itemsize + true.dtype.itemsize
        desired_rows = MAX_PIPELINE_BYTES // (2 * LANE * itemsize_sum)
        row_tile = min(desired_rows, -(-rows // 32) * 32)
        row_tile = max(32, (row_tile // 32) * 32)     # mult of 32: f32/bf16/int8 OK

        num_blocks = pl.cdiv(rows, row_tile)
        blocks_per_core = pl.cdiv(num_blocks, num_cores)
        rem_last = rows - (num_blocks - 1) * row_tile  # valid rows in last block

        def in_block_map(c, i):
            # Clamp so overhang grid steps never index past the array; the
            # kernel skips their compute/accumulate via pl.when.
            return (jnp.minimum(c * blocks_per_core + i, num_blocks - 1), 0)

        kernel = functools.partial(
            _focal_loss_kernel,
            row_tile=row_tile,
            blocks_per_core=blocks_per_core,
            num_blocks=num_blocks,
            rem_last=rem_last,
            gamma=gamma,
            alpha=alpha,
        )

        partials = pl.pallas_call(
            kernel,
            out_shape=jax.ShapeDtypeStruct((num_cores * 8, LANE), jnp.float32),
            grid_spec=pltpu.PrefetchScalarGridSpec(
                num_scalar_prefetch=0,
                grid=(num_cores, blocks_per_core),
                in_specs=[
                    pl.BlockSpec((row_tile, LANE), in_block_map),
                    pl.BlockSpec((row_tile, LANE), in_block_map),
                ],
                out_specs=pl.BlockSpec((8, LANE), lambda c, i: (c, 0)),
            ),
            compiler_params=pltpu.CompilerParams(
                dimension_semantics=("parallel", "arbitrary"),
                vmem_limit_bytes=32 * 1024 * 1024,
            ),
        )(pred2d, true2d)

        total = total + jnp.sum(partials)

    if n_tail:
        total = total + _focal_sum_jnp(pred_f[n_main:], true_f[n_main:],
                                       gamma, alpha)

    if reduction == 'mean':
        return total * (1.0 / n_total)   # Python-constant reciprocal
    return total  # 'sum'


def focal_loss_ref(pred, true, gamma=1.5, alpha=0.25):
    """Pure-JAX reference matching the PyTorch module (reduction='mean')."""
    pred = pred.astype(jnp.float32)
    true = true.astype(jnp.float32)
    bce = jnp.maximum(pred, 0.0) - pred * true + jnp.log1p(jnp.exp(-jnp.abs(pred)))
    pred_prob = jax.nn.sigmoid(pred)
    p_t = true * pred_prob + (1.0 - true) * (1.0 - pred_prob)
    alpha_factor = true * alpha + (1.0 - true) * (1.0 - alpha)
    modulating_factor = (1.0 - p_t) ** gamma
    loss = bce * alpha_factor * modulating_factor
    return jnp.mean(loss)


if __name__ == "__main__":
    key = jax.random.PRNGKey(0)
    k1, k2, k3, k4, k5, k6 = jax.random.split(key, 6)

    # Primary: NCHW-like shape consistent with the PyTorch module's inputs.
    B, C, H, W = 2, 4, 16, 16
    pred = jax.random.normal(k1, (B, C, H, W), dtype=jnp.float32) * 2.0
    true = (jax.random.uniform(k2, (B, C, H, W)) > 0.5).astype(jnp.float32)
    out = jax.block_until_ready(focal_loss(pred, true))
    ref = jax.block_until_ready(focal_loss_ref(pred, true))
    assert jnp.allclose(out, ref, rtol=1e-5, atol=1e-6), (out, ref)

    # Non-128-divisible size: exercises the aligned-prefix + jnp-tail path.
    pred2 = jax.random.normal(k3, (3, 5, 7, 9), dtype=jnp.float32)
    true2 = (jax.random.uniform(k4, (3, 5, 7, 9)) > 0.5).astype(jnp.float32)
    out2 = jax.block_until_ready(focal_loss(pred2, true2))
    ref2 = jax.block_until_ready(focal_loss_ref(pred2, true2))
    assert jnp.allclose(out2, ref2, rtol=1e-5, atol=1e-6), (out2, ref2)

    # Multi-block size: interior (unmasked) + last (masked) blocks and the
    # parallel core axis / overhang skip.
    pred3 = jax.random.normal(k5, (4, 4, 512, 160), dtype=jnp.float32)
    true3 = (jax.random.uniform(k6, (4, 4, 512, 160)) > 0.5).astype(jnp.float32)
    out3 = jax.block_until_ready(focal_loss(pred3, true3))
    ref3 = jax.block_until_ready(focal_loss_ref(pred3, true3))
    assert jnp.allclose(out3, ref3, rtol=5e-5, atol=1e-6), (out3, ref3)

    # bf16 inputs (halved HBM traffic); both kernel and reference consume the
    # same bf16 values, so agreement stays tight.
    out4 = jax.block_until_ready(
        focal_loss(pred.astype(jnp.bfloat16), true.astype(jnp.bfloat16)))
    ref4 = jax.block_until_ready(
        focal_loss_ref(pred.astype(jnp.bfloat16), true.astype(jnp.bfloat16)))
    assert jnp.allclose(out4, ref4, rtol=1e-4, atol=1e-5), (out4, ref4)

    print("KERNEL_OK")
</pallas_src>

<mosaic_0001>
module attributes {stable_mosaic.version = 11 : i64} {
  func.func @_focal_loss_kernel(%arg0: i32, %arg1: i32, %arg2: memref<32x128xf32, #tpu.memory_space<vmem>>, %arg3: memref<32x128xf32, #tpu.memory_space<vmem>>, %arg4: memref<8x128xf32, #tpu.memory_space<vmem>>) attributes {dimension_semantics = [#tpu.dimension_semantics<parallel>, #tpu.dimension_semantics<arbitrary>], iteration_bounds = array<i64: 2, 1>, scalar_prefetch = 0 : i64, scratch_operands = 0 : i64, tpu.core_type = #tpu.core_type<tc>, window_params = [{transform_indices = @transform_0, window_bounds = array<i64: 32, 128>}, {transform_indices = @transform_1, window_bounds = array<i64: 32, 128>}, {transform_indices = @transform_2, window_bounds = array<i64: 8, 128>}]} {
    %c0_i32 = arith.constant 0 : i32
    %0 = arith.cmpi eq, %arg1, %c0_i32 : i32
    %1 = arith.extui %0 : i1 to i32
    %c0_i32_0 = arith.constant 0 : i32
    %2 = arith.cmpi ne, %1, %c0_i32_0 : i32
    scf.if %2 {
      %cst = arith.constant 0.000000e+00 : f32
      %11 = vector.broadcast %cst : f32 to vector<8x128xf32>
      %c0 = arith.constant 0 : index
      %c0_5 = arith.constant 0 : index
      %12 = vector.load %arg4[%c0, %c0_5] : memref<8x128xf32, #tpu.memory_space<vmem>>, vector<8x128xf32>
      tpu.vector_store %arg4[%c0, %c0_5], %11 {strides = array<i32>} : memref<8x128xf32, #tpu.memory_space<vmem>>, vector<8x128xf32>,
    } else {
    }
    %c1_i32 = arith.constant 1 : i32
    %3 = arith.muli %arg0, %c1_i32 : i32
    %4 = arith.addi %3, %arg1 : i32
    %c0_i32_1 = arith.constant 0 : i32
    %5 = arith.cmpi slt, %4, %c0_i32_1 : i32
    %6 = arith.extui %5 : i1 to i32
    %c0_i32_2 = arith.constant 0 : i32
    %7 = arith.cmpi ne, %6, %c0_i32_2 : i32
    scf.if %7 {
      %c0 = arith.constant 0 : index
      %c0_5 = arith.constant 0 : index
      %11 = vector.load %arg2[%c0, %c0_5] : memref<32x128xf32, #tpu.memory_space<vmem>>, vector<32x128xf32>
      %c0_6 = arith.constant 0 : index
      %c0_7 = arith.constant 0 : index
      %12 = vector.load %arg3[%c0_6, %c0_7] : memref<32x128xf32, #tpu.memory_space<vmem>>, vector<32x128xf32>
      %13 = math.absf %11 : vector<32x128xf32>
      %cst = arith.constant 0.000000e+00 : f32
      %14 = vector.broadcast %cst : f32 to vector<32x128xf32>
      %15 = arith.subf %14, %13 : vector<32x128xf32>
      %16 = math.exp %15 : vector<32x128xf32>
      %cst_8 = arith.constant 1.000000e+00 : f32
      %17 = vector.broadcast %cst_8 : f32 to vector<32x128xf32>
      %18 = arith.addf %17, %16 : vector<32x128xf32>
      %19 = tpu.reciprocal %18 {approx = true} : vector<32x128xf32> -> vector<32x128xf32>
      %20 = arith.mulf %18, %19 : vector<32x128xf32>
      %cst_9 = arith.constant 2.000000e+00 : f32
      %21 = vector.broadcast %cst_9 : f32 to vector<32x128xf32>
      %22 = arith.subf %21, %20 : vector<32x128xf32>
      %23 = arith.mulf %19, %22 : vector<32x128xf32>
      %cst_10 = arith.constant 0.000000e+00 : f32
      %24 = vector.broadcast %cst_10 : f32 to vector<32x128xf32>
      %25 = arith.maximumf %11, %24 : vector<32x128xf32>
      %26 = arith.mulf %11, %12 : vector<32x128xf32>
      %27 = arith.subf %25, %26 : vector<32x128xf32>
      %28 = math.log1p %16 : vector<32x128xf32>
      %29 = arith.addf %27, %28 : vector<32x128xf32>
      %cst_11 = arith.constant 0.000000e+00 : f32
      %30 = vector.broadcast %cst_11 : f32 to vector<32x128xf32>
      %31 = arith.cmpf oge, %11, %30 : vector<32x128xf32>
      %32 = arith.mulf %16, %23 : vector<32x128xf32>
      %33 = arith.select %31, %23, %32 : vector<32x128xi1>, vector<32x128xf32>
      %cst_12 = arith.constant 2.000000e+00 : f32
      %34 = vector.broadcast %cst_12 : f32 to vector<32x128xf32>
      %35 = arith.mulf %34, %33 : vector<32x128xf32>
      %cst_13 = arith.constant 1.000000e+00 : f32
      %36 = vector.broadcast %cst_13 : f32 to vector<32x128xf32>
      %37 = arith.subf %36, %35 : vector<32x128xf32>
      %38 = arith.mulf %12, %37 : vector<32x128xf32>
      %39 = arith.addf %33, %38 : vector<32x128xf32>
      %cst_14 = arith.constant -5.000000e-01 : f32
      %40 = vector.broadcast %cst_14 : f32 to vector<32x128xf32>
      %41 = arith.mulf %12, %40 : vector<32x128xf32>
      %cst_15 = arith.constant 7.500000e-01 : f32
      %42 = vector.broadcast %cst_15 : f32 to vector<32x128xf32>
      %43 = arith.addf %42, %41 : vector<32x128xf32>
      %44 = math.sqrt %39 : vector<32x128xf32>
      %45 = arith.mulf %39, %44 : vector<32x128xf32>
      %46 = arith.mulf %29, %43 : vector<32x128xf32>
      %47 = arith.mulf %46, %45 : vector<32x128xf32>
      %c0_16 = arith.constant 0 : index
      %c0_17 = arith.constant 0 : index
      %48 = vector.load %arg4[%c0_16, %c0_17] : memref<8x128xf32, #tpu.memory_space<vmem>>, vector<8x128xf32>
      %49 = vector.shape_cast %47 : vector<32x128xf32> to vector<4x8x128xf32>
      %cst_18 = arith.constant dense<0.000000e+00> : vector<8x128xf32>
      %50 = vector.multi_reduction <add>, %49, %cst_18 [0] : vector<4x8x128xf32> to vector<8x128xf32>
      %51 = arith.addf %48, %50 : vector<8x128xf32>
      %c0_19 = arith.constant 0 : index
      %c0_20 = arith.constant 0 : index
      %52 = vector.load %arg4[%c0_19, %c0_20] : memref<8x128xf32, #tpu.memory_space<vmem>>, vector<8x128xf32>
      tpu.vector_store %arg4[%c0_19, %c0_20], %51 {strides = array<i32>} : memref<8x128xf32, #tpu.memory_space<vmem>>, vector<8x128xf32>,
    } else {
    }
    %c0_i32_3 = arith.constant 0 : i32
    %8 = arith.cmpi eq, %4, %c0_i32_3 : i32
    %9 = arith.extui %8 : i1 to i32
    %c0_i32_4 = arith.constant 0 : i32
    %10 = arith.cmpi ne, %9, %c0_i32_4 : i32
    scf.if %10 {
      %11 = tpu.iota {dimensions = array<i32: 0>} : vector<32x128xi32>
      %c16_i32 = arith.constant 16 : i32
      %12 = vector.broadcast %c16_i32 : i32 to vector<32x128xi32>
      %13 = arith.cmpi slt, %11, %12 : vector<32x128xi32>
      %c0 = arith.constant 0 : index
      %c0_5 = arith.constant 0 : index
      %14 = vector.load %arg2[%c0, %c0_5] : memref<32x128xf32, #tpu.memory_space<vmem>>, vector<32x128xf32>
      %c0_6 = arith.constant 0 : index
      %c0_7 = arith.constant 0 : index
      %15 = vector.load %arg3[%c0_6, %c0_7] : memref<32x128xf32, #tpu.memory_space<vmem>>, vector<32x128xf32>
      %16 = math.absf %14 : vector<32x128xf32>
      %cst = arith.constant 0.000000e+00 : f32
      %17 = vector.broadcast %cst : f32 to vector<32x128xf32>
      %18 = arith.subf %17, %16 : vector<32x128xf32>
      %19 = math.exp %18 : vector<32x128xf32>
      %cst_8 = arith.constant 1.000000e+00 : f32
      %20 = vector.broadcast %cst_8 : f32 to vector<32x128xf32>
      %21 = arith.addf %20, %19 : vector<32x128xf32>
      %22 = tpu.reciprocal %21 {approx = true} : vector<32x128xf32> -> vector<32x128xf32>
      %23 = arith.mulf %21, %22 : vector<32x128xf32>
      %cst_9 = arith.constant 2.000000e+00 : f32
      %24 = vector.broadcast %cst_9 : f32 to vector<32x128xf32>
      %25 = arith.subf %24, %23 : vector<32x128xf32>
      %26 = arith.mulf %22, %25 : vector<32x128xf32>
      %cst_10 = arith.constant 0.000000e+00 : f32
      %27 = vector.broadcast %cst_10 : f32 to vector<32x128xf32>
      %28 = arith.maximumf %14, %27 : vector<32x128xf32>
      %29 = arith.mulf %14, %15 : vector<32x128xf32>
      %30 = arith.subf %28, %29 : vector<32x128xf32>
      %31 = math.log1p %19 : vector<32x128xf32>
      %32 = arith.addf %30, %31 : vector<32x128xf32>
      %cst_11 = arith.constant 0.000000e+00 : f32
      %33 = vector.broadcast %cst_11 : f32 to vector<32x128xf32>
      %34 = arith.cmpf oge, %14, %33 : vector<32x128xf32>
      %35 = arith.mulf %19, %26 : vector<32x128xf32>
      %36 = arith.select %34, %26, %35 : vector<32x128xi1>, vector<32x128xf32>
      %cst_12 = arith.constant 2.000000e+00 : f32
      %37 = vector.broadcast %cst_12 : f32 to vector<32x128xf32>
      %38 = arith.mulf %37, %36 : vector<32x128xf32>
      %cst_13 = arith.constant 1.000000e+00 : f32
      %39 = vector.broadcast %cst_13 : f32 to vector<32x128xf32>
      %40 = arith.subf %39, %38 : vector<32x128xf32>
      %41 = arith.mulf %15, %40 : vector<32x128xf32>
      %42 = arith.addf %36, %41 : vector<32x128xf32>
      %cst_14 = arith.constant -5.000000e-01 : f32
      %43 = vector.broadcast %cst_14 : f32 to vector<32x128xf32>
      %44 = arith.mulf %15, %43 : vector<32x128xf32>
      %cst_15 = arith.constant 7.500000e-01 : f32
      %45 = vector.broadcast %cst_15 : f32 to vector<32x128xf32>
      %46 = arith.addf %45, %44 : vector<32x128xf32>
      %47 = math.sqrt %42 : vector<32x128xf32>
      %48 = arith.mulf %42, %47 : vector<32x128xf32>
      %49 = arith.mulf %32, %46 : vector<32x128xf32>
      %50 = arith.mulf %49, %48 : vector<32x128xf32>
      %cst_16 = arith.constant 0.000000e+00 : f32
      %51 = vector.broadcast %cst_16 : f32 to vector<32x128xf32>
      %52 = arith.select %13, %50, %51 : vector<32x128xi1>, vector<32x128xf32>
      %c0_17 = arith.constant 0 : index
      %c0_18 = arith.constant 0 : index
      %53 = vector.load %arg4[%c0_17, %c0_18] : memref<8x128xf32, #tpu.memory_space<vmem>>, vector<8x128xf32>
      %54 = vector.shape_cast %52 : vector<32x128xf32> to vector<4x8x128xf32>
      %cst_19 = arith.constant dense<0.000000e+00> : vector<8x128xf32>
      %55 = vector.multi_reduction <add>, %54, %cst_19 [0] : vector<4x8x128xf32> to vector<8x128xf32>
      %56 = arith.addf %53, %55 : vector<8x128xf32>
      %c0_20 = arith.constant 0 : index
      %c0_21 = arith.constant 0 : index
      %57 = vector.load %arg4[%c0_20, %c0_21] : memref<8x128xf32, #tpu.memory_space<vmem>>, vector<8x128xf32>
      tpu.vector_store %arg4[%c0_20, %c0_21], %56 {strides = array<i32>} : memref<8x128xf32, #tpu.memory_space<vmem>>, vector<8x128xf32>,
    } else {
    }
    return
  }
  func.func @transform_0(%arg0: i32, %arg1: i32) -> (i32, i32) {
    %c1_i32 = arith.constant 1 : i32
    %0 = arith.muli %arg0, %c1_i32 : i32
    %1 = arith.addi %0, %arg1 : i32
    %c0_i32 = arith.constant 0 : i32
    %2 = arith.minsi %1, %c0_i32 : i32
    %c0_i32_0 = arith.constant 0 : i32
    %c0_i32_1 = arith.constant 0 : i32
    return %2, %c0_i32_0 : i32, i32
  }
  func.func @transform_1(%arg0: i32, %arg1: i32) -> (i32, i32) {
    %c1_i32 = arith.constant 1 : i32
    %0 = arith.muli %arg0, %c1_i32 : i32
    %1 = arith.addi %0, %arg1 : i32
    %c0_i32 = arith.constant 0 : i32
    %2 = arith.minsi %1, %c0_i32 : i32
    %c0_i32_0 = arith.constant 0 : i32
    %c0_i32_1 = arith.constant 0 : i32
    return %2, %c0_i32_0 : i32, i32
  }
  func.func @transform_2(%arg0: i32, %arg1: i32) -> (i32, i32) {
    %c0_i32 = arith.constant 0 : i32
    %c0_i32_0 = arith.constant 0 : i32
    return %arg0, %c0_i32 : i32, i32
  }
}

</mosaic_0001>

<llo_original>
// kernel: tpu_custom_call.1
$region0: #{tpu_custom_call.1}
  #allocation0 [shape = 'u32[]', space=smem, size = 0x4, offset = 0x4, fixed_abs, tag = 'smem constant byte address 0x4 - core index']
  #allocation1 [shape = 'u32[144,128]{1,0:T(1,128)}', space=vmem, size = 0x12000, scoped, tag = 'internal scratch']
  %s0 = inlined_call_operand.hbm [shape: f32[16,128], index: 0, kind: input, shape index: {}]
  %s1 = inlined_call_operand.hbm [shape: f32[16,128], index: 1, kind: input, shape index: {}]
  %s2 = inlined_call_operand.hbm [shape: f32[16,128], index: 2, kind: output, shape index: {}]
  %s3 = sld [smem:[#allocation0]]
  $region61: #{tpu_custom_call.1} parent=0
    _
  %s5 = ssub.s32 1, %s3
  %s6 = scalar_select 0, %s5, %s3
  $region1: #{tpu_custom_call.1} parent=0
    #allocation2 [shape = 'u8[32768]{0}', space=vmem, size = 0x8000, scoped, tag = 'input window, operand 0']
    #allocation3 [shape = 's32[2]{0}', space=sflag, size = 0x8, scoped, tag = 'scoped memory for tpu_custom_call.1']
    #allocation4 [shape = 's32[2]{0}', space=sflag, size = 0x8, scoped, tag = 'scoped memory for tpu_custom_call.1']
    #allocation5 [shape = 'u8[32768]{0}', space=vmem, size = 0x8000, scoped, tag = 'input window, operand 1']
    #allocation6 [shape = 's32[2]{0}', space=sflag, size = 0x8, scoped, tag = 'scoped memory for tpu_custom_call.1']
    #allocation7 [shape = 'u8[8192]{0}', space=vmem, size = 0x2000, scoped, tag = 'output window, operand 0']
    %7 = vsyncpa [#allocation3], 0
    %s8 = scalar_lea.sflag [#allocation3], 1
    %9 = vsyncpa %s8, 0
    %10 = vsyncpa [#allocation6], 0
    %s11 = scalar_lea.sflag [#allocation6], 1
    %12 = vsyncpa %s11, 0
    %13 = vsyncpa [#allocation4], 0
    %s14 = scalar_lea.sflag [#allocation4], 1
    %15 = vsyncpa %s14, 0
    loop: start=0, step=1, limit=4
    $region2: #{tpu_custom_call.1} parent=1 // loop_pre_header
      _
    $region3: #{tpu_custom_call.1} parent=1 // loop_header
      %s17 = sphi 0, %s21
      %p18 = scmp.ge.s32.totalorder %s17, 4
      %s24 = sphi 0, %s36
      %s25 = sphi 0, %s32
      %s26 = sphi 0, %s24
      %s27 = sphi 0, %s25
      %s28 = sphi 0, %s26
      %s29 = sphi 0, %s27
      %s45 = sphi 0, %s47
      %s48 = sphi 0, %s45
      %s49 = sphi 0, %s48
      %s65 = sphi 0, %s49
      %s77 = sphi 0, %s79
      %s80 = sphi 0, %s77
      %s81 = sphi 0, %s80
      %s97 = sphi 0, %s81
      %s103 = sphi 0, %s105
      %s106 = sphi 0, %s103
      %s107 = sphi 0, %s106
      %s123 = sphi 0, %s107
    $region4: #{tpu_custom_call.1} parent=1 // loop_header_branch
      %20 = sbr.rel (%p18) target = $region8
    $region5: #{tpu_custom_call.1} parent=1 // loop_body
      %s22 = ssub.s32 %s17, 1
      %s23 = ssub.s32 %s17, 2
      %s30 = sadd.s32 1, %s25
      %p31 = scmp.ge.s32.totalorder %s30, 1
      %s32 = scalar_select %p31, 0, %s30
      %s33 = sadd.s32 1, %s24
      %s34 = scalar_select %p31, %s33, %s24
      %p35 = scmp.ge.s32.totalorder %s34, 2
      %s36 = scalar_select %p35, 0, %s34
      %s37 = sadd.s32 %s24, %s25
      %p38 = scmp.lt.s32.totalorder %s37, 0
      %s39 = scalar_select %p38, %s37, 0
      %s40 = sadd.s32 %s36, %s32
      %p41 = scmp.lt.s32.totalorder %s40, 0
      %s42 = scalar_select %p41, %s40, 0
      %s43 = ssub.s32 %s39, %s42
      %p44 = scmp.eq.s32.totalorder %s43, 0
      %s46 = sadd.s32 %s45, 1
      %s47 = scalar_select %p44, %s45, %s46
      %p50 = pneg %p44
      %p51 = scmp.eq.s32.totalorder %s17, 1
      %p52 = por %p50, %p51
      %p53 = scmp.ne.s32.totalorder %s45, %s48
      %p54 = scmp.eq.s32.totalorder %s17, 0
      %p55 = por %p53, %p54
      %p56 = scmp.ne.s32.totalorder %s45, %s48
      %p57 = scmp.eq.s32.totalorder %s22, 1
      %p58 = por %p56, %p57
      %p59 = scmp.ne.s32.totalorder %s48, %s49
      %p60 = scmp.eq.s32.totalorder %s22, 0
      %p61 = por %p59, %p60
      %p62 = scmp.ne.s32.totalorder %s48, %s49
      %p63 = scmp.eq.s32.totalorder %s23, 1
      %p64 = por %p62, %p63
      %p66 = scmp.ne.s32.totalorder %s49, %s65
      %p67 = scmp.eq.s32.totalorder %s23, 0
      %p68 = por %p66, %p67
      %s69 = sadd.s32 %s24, %s25
      %p70 = scmp.lt.s32.totalorder %s69, 0
      %s71 = scalar_select %p70, %s69, 0
      %s72 = sadd.s32 %s36, %s32
      %p73 = scmp.lt.s32.totalorder %s72, 0
      %s74 = scalar_select %p73, %s72, 0
      %s75 = ssub.s32 %s71, %s74
      %p76 = scmp.eq.s32.totalorder %s75, 0
      %s78 = sadd.s32 %s77, 1
      %s79 = scalar_select %p76, %s77, %s78
      %p82 = pneg %p76
      %p83 = scmp.eq.s32.totalorder %s17, 1
      %p84 = por %p82, %p83
      %p85 = scmp.ne.s32.totalorder %s77, %s80
      %p86 = scmp.eq.s32.totalorder %s17, 0
      %p87 = por %p85, %p86
      %p88 = scmp.ne.s32.totalorder %s77, %s80
      %p89 = scmp.eq.s32.totalorder %s22, 1
      %p90 = por %p88, %p89
      %p91 = scmp.ne.s32.totalorder %s80, %s81
      %p92 = scmp.eq.s32.totalorder %s22, 0
      %p93 = por %p91, %p92
      %p94 = scmp.ne.s32.totalorder %s80, %s81
      %p95 = scmp.eq.s32.totalorder %s23, 1
      %p96 = por %p94, %p95
      %p98 = scmp.ne.s32.totalorder %s81, %s97
      %p99 = scmp.eq.s32.totalorder %s23, 0
      %p100 = por %p98, %p99
      %s101 = ssub.s32 %s24, %s36
      %p102 = scmp.eq.s32.totalorder %s101, 0
      %s104 = sadd.s32 %s103, 1
      %s105 = scalar_select %p102, %s103, %s104
      %p108 = pneg %p102
      %p109 = scmp.eq.s32.totalorder %s17, 1
      %p110 = por %p108, %p109
      %p111 = scmp.ne.s32.totalorder %s103, %s106
      %p112 = scmp.eq.s32.totalorder %s17, 0
      %p113 = por %p111, %p112
      %p114 = scmp.ne.s32.totalorder %s103, %s106
      %p115 = scmp.eq.s32.totalorder %s22, 1
      %p116 = por %p114, %p115
      %p117 = scmp.ne.s32.totalorder %s106, %s107
      %p118 = scmp.eq.s32.totalorder %s22, 0
      %p119 = por %p117, %p118
      %p120 = scmp.ne.s32.totalorder %s106, %s107
      %p121 = scmp.eq.s32.totalorder %s23, 1
      %p122 = por %p120, %p121
      %p124 = scmp.ne.s32.totalorder %s107, %s123
      %p125 = scmp.eq.s32.totalorder %s23, 0
      %p126 = por %p124, %p125
      %p127 = scmp.le.s32.totalorder 1, %s17
      %p128 = scmp.lt.s32.totalorder %s17, 3
      %p129 = pnand %p127, %p128
      %p130 = pneg %p129
      // Predicated region
      $region9: #{tpu_custom_call.1} parent=5 // pred_check
        _
      $region10: #{tpu_custom_call.1} parent=5 // pred_check_branch
        %132 = sbr.rel (%p129) target = $region12
      $region11: #{tpu_custom_call.1} parent=5 // pred_region
        %s133 = ssub.s32 %s17, 1
      $region12: #{tpu_custom_call.1} parent=5 // pred_fallthru
        _
      %p134 = scmp.lt.s32.totalorder %s17, 2
      // Predicated region
      $region13: #{tpu_custom_call.1} parent=5 // pred_check
        %p135 = pneg %p134
      $region14: #{tpu_custom_call.1} parent=5 // pred_check_branch
        %137 = sbr.rel (%p135) target = $region16
      $region15: #{tpu_custom_call.1} parent=5 // pred_region
        // Predicated region
        $region17: #{tpu_custom_call.1} parent=15 // pred_check
          %p138 = pneg %p55
        $region18: #{tpu_custom_call.1} parent=15 // pred_check_branch
          %140 = sbr.rel (%p138) target = $region20
        $region19: #{tpu_custom_call.1} parent=15 // pred_region
          %s141 = sand.u32 %s45, 1
          %s142 = scalar_lea.sflag [#allocation3], %s141
          %s143 = sand.u32 %s45, 1
          %s144 = smul.addr %s143, 32
          %s145 = scalar_lea.vmem [#allocation2], %s144
          %s146 = sadd.s32 %s24, %s25
          %p147 = scmp.lt.s32.totalorder %s146, 0
          %s148 = scalar_select %p147, %s146, 0
          %s149 = smul.u32 4, %s148
          %s150 = ssub.s32 2, %s149
          %s151 = smul.u32 128, %s150
          %s153 = ssub.s32 512, %s151
          %154 = vsyncadd %s142, %s153
          %p155 = scmp.ne.s32.totalorder 0, %s151
          %s156 = smul.addr %s149, 128
          %s157 = scalar_lea.hbm %s0, %s156
          %s158 = smul.u32 8, %s150
          %s159 = sshll.u32 %s145, 4
          %s160 = int_to_ptr.vmem [resolvable:$true] %s159
          %s161 = sshll.u32 %s158, 4
          %165 = dma.hbm_to_vmem [thread:$0]  (%p155), %s157, %s161, %s160, %s142, 128, 128, 8
        $region20: #{tpu_custom_call.1} parent=15 // pred_fallthru
          _
        // Predicated region
        $region21: #{tpu_custom_call.1} parent=15 // pred_check
          %p166 = pneg %p87
        $region22: #{tpu_custom_call.1} parent=15 // pred_check_branch
          %168 = sbr.rel (%p166) target = $region24
        $region23: #{tpu_custom_call.1} parent=15 // pred_region
          %s169 = sand.u32 %s77, 1
          %s170 = scalar_lea.sflag [#allocation6], %s169
          %s171 = sand.u32 %s77, 1
          %s172 = smul.addr %s171, 32
          %s173 = scalar_lea.vmem [#allocation5], %s172
          %s174 = sadd.s32 %s24, %s25
          %p175 = scmp.lt.s32.totalorder %s174, 0
          %s176 = scalar_select %p175, %s174, 0
          %s177 = smul.u32 4, %s176
          %s178 = ssub.s32 2, %s177
          %s179 = smul.u32 128, %s178
          %s181 = ssub.s32 512, %s179
          %182 = vsyncadd %s170, %s181
          %p183 = scmp.ne.s32.totalorder 0, %s179
          %s184 = smul.addr %s177, 128
          %s185 = scalar_lea.hbm %s1, %s184
          %s186 = smul.u32 8, %s178
          %s187 = sshll.u32 %s173, 4
          %s188 = int_to_ptr.vmem [resolvable:$true] %s187
          %s189 = sshll.u32 %s186, 4
          %193 = dma.hbm_to_vmem [thread:$0]  (%p183), %s185, %s189, %s188, %s170, 128, 128, 8
        $region24: #{tpu_custom_call.1} parent=15 // pred_fallthru
          _
      $region16: #{tpu_custom_call.1} parent=5 // pred_fallthru
        _
      %p194 = scmp.le.s32.totalorder 1, %s17
      %p195 = scmp.lt.s32.totalorder %s17, 3
      %p196 = pnand %p194, %p195
      %p197 = pneg %p196
      // Predicated region
      $region25: #{tpu_custom_call.1} parent=5 // pred_check
        _
      $region26: #{tpu_custom_call.1} parent=5 // pred_check_branch
        %199 = sbr.rel (%p196) target = $region28
      $region27: #{tpu_custom_call.1} parent=5 // pred_region
        %s200 = ssub.s32 %s17, 1
        %s201 = sand.u32 %s48, 1
        %s202 = scalar_lea.sflag [#allocation3], %s201
        %s203 = sand.u32 %s48, 1
        %s204 = smul.addr %s203, 32
        %s205 = scalar_lea.vmem [#allocation2], %s204
        // Predicated region
        $region29: #{tpu_custom_call.1} parent=27 // pred_check
          %p206 = pneg %p61
        $region30: #{tpu_custom_call.1} parent=27 // pred_check_branch
          %208 = sbr.rel (%p206) target = $region32
        $region31: #{tpu_custom_call.1} parent=27 // pred_region
          %209 = dma.done %s202, 512
        $region32: #{tpu_custom_call.1} parent=27 // pred_fallthru
          _
        %s210 = sand.u32 %s80, 1
        %s211 = scalar_lea.sflag [#allocation6], %s210
        %s212 = sand.u32 %s80, 1
        %s213 = smul.addr %s212, 32
        %s214 = scalar_lea.vmem [#allocation5], %s213
        // Predicated region
        $region33: #{tpu_custom_call.1} parent=27 // pred_check
          %p215 = pneg %p93
        $region34: #{tpu_custom_call.1} parent=27 // pred_check_branch
          %217 = sbr.rel (%p215) target = $region36
        $region35: #{tpu_custom_call.1} parent=27 // pred_region
          %218 = dma.done %s211, 512
        $region36: #{tpu_custom_call.1} parent=27 // pred_fallthru
          _
        %s219 = sand.u32 %s48, 1
        %s220 = scalar_lea.sflag [#allocation3], %s219
        %s221 = sand.u32 %s48, 1
        %s222 = smul.addr %s221, 32
        %s223 = scalar_lea.vmem [#allocation2], %s222
        %p224 = pneg %p61
        %p225 = pneg %p58
        %s226 = sand.u32 %s80, 1
        %s227 = scalar_lea.sflag [#allocation6], %s226
        %s228 = sand.u32 %s80, 1
        %s229 = smul.addr %s228, 32
        %s230 = scalar_lea.vmem [#allocation5], %s229
        %p231 = pneg %p93
        %p232 = pneg %p90
        %p233 = pneg %p119
        %p234 = pneg %p116
        %s235 = sand.u32 %s106, 1
        %s236 = scalar_lea.sflag [#allocation4], %s235
        %s237 = sand.u32 %s106, 1
        %s238 = smul.addr %s237, 8
        %s239 = scalar_lea.vmem [#allocation7], %s238
        %s240 = sadd.s32 %s26, %s27
        %p241 = scmp.lt.s32.totalorder %s240, 0
        %s242 = scalar_select %p241, %s240, 0
        %s243 = smul.u32 4, %s242
        %s244 = ssub.s32 2, %s243
        %s245 = smul.u32 128, %s244
        %s246 = sadd.s32 %s26, %s27
        %p247 = scmp.lt.s32.totalorder %s246, 0
        %s248 = scalar_select %p247, %s246, 0
        %s249 = smul.u32 4, %s248
        %s250 = ssub.s32 2, %s249
        %s251 = smul.u32 128, %s250
        %p252 = scmp.eq.s32.totalorder %s27, 0
        // Predicated region
        $region37: #{tpu_custom_call.1} parent=27 // pred_check
          %p253 = pneg %p252
        $region38: #{tpu_custom_call.1} parent=27 // pred_check_branch
          %255 = sbr.rel (%p253) target = $region40
        $region39: #{tpu_custom_call.1} parent=27 // pred_region
          %256 = vst [vmem:[%s239] sm:$0xff] 0.0
        $region40: #{tpu_custom_call.1} parent=27 // pred_fallthru
          _
        %s257 = sadd.s32 %s26, %s27
        %p258 = scmp.lt.s32.totalorder %s257, 0
        // Predicated region
        $region41: #{tpu_custom_call.1} parent=27 // pred_check
          %p259 = pneg %p258
        $region42: #{tpu_custom_call.1} parent=27 // pred_check_branch
          %261 = sbr.rel (%p259) target = $region44
        $region43: #{tpu_custom_call.1} parent=27 // pred_region
          %v262 = vld [vmem:[%s205] sm:$0xff]
          %v263 = vld [vmem:[%s205 + $0x8] sm:$0xff]
          %v264 = vld [vmem:[%s205 + $0x10] sm:$0xff]
          %v265 = vld [vmem:[%s205 + $0x18] sm:$0xff]
          %v266 = vld [vmem:[%s214] sm:$0xff]
          %v267 = vld [vmem:[%s214 + $0x8] sm:$0xff]
          %v268 = vld [vmem:[%s214 + $0x10] sm:$0xff]
          %v269 = vld [vmem:[%s214 + $0x18] sm:$0xff]
          %v270 = vand.u32 2147483647, %v262
          %v271 = vand.u32 2147483647, %v263
          %v272 = vand.u32 2147483647, %v264
          %v273 = vand.u32 2147483647, %v265
          %v274 = vsub.f32 0.0, %v270
          %v275 = vsub.f32 0.0, %v271
          %v276 = vsub.f32 0.0, %v272
          %v277 = vsub.f32 0.0, %v273
          %v278 = vmul.f32 %v274, 1.442695
          %v279 = vpow.pop %v278
          %v280 = vmul.f32 %v275, 1.442695
          %v281 = vpow.pop %v280
          %v282 = vmul.f32 %v276, 1.442695
          %v283 = vpow.pop %v282
          %v284 = vmul.f32 %v277, 1.442695
          %v285 = vpow.pop %v284
          %v286 = vadd.f32 %v279, 1.0
          %v287 = vadd.f32 %v281, 1.0
          %v288 = vadd.f32 %v283, 1.0
          %v289 = vadd.f32 %v285, 1.0
          %v290 = vrcp.pop %v286
          %v291 = vrcp.pop %v287
          %v292 = vrcp.pop %v288
          %v293 = vrcp.pop %v289
          %v294 = vmul.f32 %v286, %v290
          %v295 = vmul.f32 %v287, %v291
          %v296 = vmul.f32 %v288, %v292
          %v297 = vmul.f32 %v289, %v293
          %v298 = vsub.f32 2.0, %v294
          %v299 = vsub.f32 2.0, %v295
          %v300 = vsub.f32 2.0, %v296
          %v301 = vsub.f32 2.0, %v297
          %v302 = vmul.f32 %v290, %v298
          %v303 = vmul.f32 %v291, %v299
          %v304 = vmul.f32 %v292, %v300
          %v305 = vmul.f32 %v293, %v301
          %v306 = vmax.f32 %v262, 0.0
          %v307 = vmax.f32 %v263, 0.0
          %v308 = vmax.f32 %v264, 0.0
          %v309 = vmax.f32 %v265, 0.0
          %v310 = vmul.f32 %v262, %v266
          %v311 = vmul.f32 %v263, %v267
          %v312 = vmul.f32 %v264, %v268
          %v313 = vmul.f32 %v265, %v269
          %v314 = vsub.f32 %v306, %v310
          %v315 = vsub.f32 %v307, %v311
          %v316 = vsub.f32 %v308, %v312
          %v317 = vsub.f32 %v309, %v313
          %v318 = vadd.f32 %v279, 1.0
          %v319 = vlog2.pop %v318
          %v320 = vmul.f32 %v319, 0.6931472
          %v321 = vmul.f32 -0.5, %v279
          %v322 = vadd.f32 %v321, 1.0
          %v323 = vmul.f32 %v322, %v279
          %v324 = vand.u32 2147483647, %v279
          %vm325 = vcmp.lt.f32.partialorder %v324, 0.0004427343
          %v326 = vsel %vm325, %v323, %v320
          %v327 = vadd.f32 %v281, 1.0
          %v328 = vlog2.pop %v327
          %v329 = vmul.f32 %v328, 0.6931472
          %v330 = vmul.f32 -0.5, %v281
          %v331 = vadd.f32 %v330, 1.0
          %v332 = vmul.f32 %v331, %v281
          %v333 = vand.u32 2147483647, %v281
          %vm334 = vcmp.lt.f32.partialorder %v333, 0.0004427343
          %v335 = vsel %vm334, %v332, %v329
          %v336 = vadd.f32 %v283, 1.0
          %v337 = vlog2.pop %v336
          %v338 = vmul.f32 %v337, 0.6931472
          %v339 = vmul.f32 -0.5, %v283
          %v340 = vadd.f32 %v339, 1.0
          %v341 = vmul.f32 %v340, %v283
          %v342 = vand.u32 2147483647, %v283
          %vm343 = vcmp.lt.f32.partialorder %v342, 0.0004427343
          %v344 = vsel %vm343, %v341, %v338
          %v345 = vadd.f32 %v285, 1.0
          %v346 = vlog2.pop %v345
          %v347 = vmul.f32 %v346, 0.6931472
          %v348 = vmul.f32 -0.5, %v285
          %v349 = vadd.f32 %v348, 1.0
          %v350 = vmul.f32 %v349, %v285
          %v351 = vand.u32 2147483647, %v285
          %vm352 = vcmp.lt.f32.partialorder %v351, 0.0004427343
          %v353 = vsel %vm352, %v350, %v347
          %v354 = vadd.f32 %v314, %v326
          %v355 = vadd.f32 %v315, %v335
          %v356 = vadd.f32 %v316, %v344
          %v357 = vadd.f32 %v317, %v353
          %vm358 = vcmp.ge.f32.partialorder %v262, 0.0
          %vm359 = vcmp.ge.f32.partialorder %v263, 0.0
          %vm360 = vcmp.ge.f32.partialorder %v264, 0.0
          %vm361 = vcmp.ge.f32.partialorder %v265, 0.0
          %v362 = vmul.f32 %v279, %v302
          %v363 = vmul.f32 %v281, %v303
          %v364 = vmul.f32 %v283, %v304
          %v365 = vmul.f32 %v285, %v305
          %v366 = vsel %vm358, %v302, %v362
          %v367 = vsel %vm359, %v303, %v363
          %v368 = vsel %vm360, %v304, %v364
          %v369 = vsel %vm361, %v305, %v365
          %v370 = vmul.f32 %v366, 2.0
          %v371 = vmul.f32 %v367, 2.0
          %v372 = vmul.f32 %v368, 2.0
          %v373 = vmul.f32 %v369, 2.0
          %v374 = vsub.f32 1.0, %v370
          %v375 = vsub.f32 1.0, %v371
          %v376 = vsub.f32 1.0, %v372
          %v377 = vsub.f32 1.0, %v373
          %v378 = vmul.f32 %v266, %v374
          %v379 = vmul.f32 %v267, %v375
          %v380 = vmul.f32 %v268, %v376
          %v381 = vmul.f32 %v269, %v377
          %v382 = vadd.f32 %v366, %v378
          %v383 = vadd.f32 %v367, %v379
          %v384 = vadd.f32 %v368, %v380
          %v385 = vadd.f32 %v369, %v381
          %v386 = vmul.f32 %v266, -0.5
          %v387 = vmul.f32 %v267, -0.5
          %v388 = vmul.f32 %v268, -0.5
          %v389 = vmul.f32 %v269, -0.5
          %v390 = vadd.f32 %v386, 0.75
          %v391 = vadd.f32 %v387, 0.75
          %v392 = vadd.f32 %v388, 0.75
          %v393 = vadd.f32 %v389, 0.75
          %v394 = vrsqrt.pop %v382
          %v395 = vmul.f32 %v382, %v394
          %vm396 = vcmp.eq.f32.partialorder %v382, inf
          %v397 = vsel %vm396, %v382, %v395
          %vm398 = vcmp.eq.f32.partialorder %v382, 0.0
          %v399 = vand.u32 %v382, 2147483648
          %v400 = vsel %vm398, %v399, %v397
          %v401 = vrsqrt.pop %v383
          %v402 = vmul.f32 %v383, %v401
          %vm403 = vcmp.eq.f32.partialorder %v383, inf
          %v404 = vsel %vm403, %v383, %v402
          %vm405 = vcmp.eq.f32.partialorder %v383, 0.0
          %v406 = vand.u32 %v383, 2147483648
          %v407 = vsel %vm405, %v406, %v404
          %v408 = vrsqrt.pop %v384
          %v409 = vmul.f32 %v384, %v408
          %vm410 = vcmp.eq.f32.partialorder %v384, inf
          %v411 = vsel %vm410, %v384, %v409
          %vm412 = vcmp.eq.f32.partialorder %v384, 0.0
          %v413 = vand.u32 %v384, 2147483648
          %v414 = vsel %vm412, %v413, %v411
          %v415 = vrsqrt.pop %v385
          %v416 = vmul.f32 %v385, %v415
          %vm417 = vcmp.eq.f32.partialorder %v385, inf
          %v418 = vsel %vm417, %v385, %v416
          %vm419 = vcmp.eq.f32.partialorder %v385, 0.0
          %v420 = vand.u32 %v385, 2147483648
          %v421 = vsel %vm419, %v420, %v418
          %v422 = vmul.f32 %v382, %v400
          %v423 = vmul.f32 %v383, %v407
          %v424 = vmul.f32 %v384, %v414
          %v425 = vmul.f32 %v385, %v421
          %v426 = vmul.f32 %v354, %v390
          %v427 = vmul.f32 %v355, %v391
          %v428 = vmul.f32 %v356, %v392
          %v429 = vmul.f32 %v357, %v393
          %v430 = vmul.f32 %v426, %v422
          %v431 = vmul.f32 %v427, %v423
          %v432 = vmul.f32 %v428, %v424
          %v433 = vmul.f32 %v429, %v425
          %v434 = vld [vmem:[%s239] sm:$0xff]
          %v435 = vadd.f32 %v430, %v431
          %v436 = vadd.f32 %v435, %v432
          %v437 = vadd.f32 %v436, %v433
          %v438 = vadd.f32 %v434, %v437
          %439 = vst [vmem:[%s239] sm:$0xff] %v438
        $region44: #{tpu_custom_call.1} parent=27 // pred_fallthru
          _
        %p440 = scmp.eq.s32.totalorder %s257, 0
        // Predicated region
        $region45: #{tpu_custom_call.1} parent=27 // pred_check
          %p441 = pneg %p440
        $region46: #{tpu_custom_call.1} parent=27 // pred_check_branch
          %443 = sbr.rel (%p441) target = $region48
        $region47: #{tpu_custom_call.1} parent=27 // pred_region
          %v444 = vlaneseq
          %v445 = vshrl.u32 %v444, 7
          %v446 = vadd.s32 %v445, 8
          %v447 = vadd.s32 %v445, 16
          %v448 = vadd.s32 %v445, 24
          %vm449 = vcmp.lt.s32.totalorder %v445, 16
          %vm450 = vcmp.lt.s32.totalorder %v446, 16
          %vm451 = vcmp.lt.s32.totalorder %v447, 16
          %vm452 = vcmp.lt.s32.totalorder %v448, 16
          %v453 = vld [vmem:[%s205] sm:$0xff]
          %v454 = vld [vmem:[%s205 + $0x8] sm:$0xff]
          %v455 = vld [vmem:[%s205 + $0x10] sm:$0xff]
          %v456 = vld [vmem:[%s205 + $0x18] sm:$0xff]
          %v457 = vld [vmem:[%s214] sm:$0xff]
          %v458 = vld [vmem:[%s214 + $0x8] sm:$0xff]
          %v459 = vld [vmem:[%s214 + $0x10] sm:$0xff]
          %v460 = vld [vmem:[%s214 + $0x18] sm:$0xff]
          %v461 = vand.u32 2147483647, %v453
          %v462 = vand.u32 2147483647, %v454
          %v463 = vand.u32 2147483647, %v455
          %v464 = vand.u32 2147483647, %v456
          %v465 = vsub.f32 0.0, %v461
          %v466 = vsub.f32 0.0, %v462
          %v467 = vsub.f32 0.0, %v463
          %v468 = vsub.f32 0.0, %v464
          %v469 = vmul.f32 %v465, 1.442695
          %v470 = vpow.pop %v469
          %v471 = vmul.f32 %v466, 1.442695
          %v472 = vpow.pop %v471
          %v473 = vmul.f32 %v467, 1.442695
          %v474 = vpow.pop %v473
          %v475 = vmul.f32 %v468, 1.442695
          %v476 = vpow.pop %v475
          %v477 = vadd.f32 %v470, 1.0
          %v478 = vadd.f32 %v472, 1.0
          %v479 = vadd.f32 %v474, 1.0
          %v480 = vadd.f32 %v476, 1.0
          %v481 = vrcp.pop %v477
          %v482 = vrcp.pop %v478
          %v483 = vrcp.pop %v479
          %v484 = vrcp.pop %v480
          %v485 = vmul.f32 %v477, %v481
          %v486 = vmul.f32 %v478, %v482
          %v487 = vmul.f32 %v479, %v483
          %v488 = vmul.f32 %v480, %v484
          %v489 = vsub.f32 2.0, %v485
          %v490 = vsub.f32 2.0, %v486
          %v491 = vsub.f32 2.0, %v487
          %v492 = vsub.f32 2.0, %v488
          %v493 = vmul.f32 %v481, %v489
          %v494 = vmul.f32 %v482, %v490
          %v495 = vmul.f32 %v483, %v491
          %v496 = vmul.f32 %v484, %v492
          %v497 = vmax.f32 %v453, 0.0
          %v498 = vmax.f32 %v454, 0.0
          %v499 = vmax.f32 %v455, 0.0
          %v500 = vmax.f32 %v456, 0.0
          %v501 = vmul.f32 %v453, %v457
          %v502 = vmul.f32 %v454, %v458
          %v503 = vmul.f32 %v455, %v459
          %v504 = vmul.f32 %v456, %v460
          %v505 = vsub.f32 %v497, %v501
          %v506 = vsub.f32 %v498, %v502
          %v507 = vsub.f32 %v499, %v503
          %v508 = vsub.f32 %v500, %v504
          %v509 = vadd.f32 %v470, 1.0
          %v510 = vlog2.pop %v509
          %v511 = vmul.f32 %v510, 0.6931472
          %v512 = vmul.f32 -0.5, %v470
          %v513 = vadd.f32 %v512, 1.0
          %v514 = vmul.f32 %v513, %v470
          %v515 = vand.u32 2147483647, %v470
          %vm516 = vcmp.lt.f32.partialorder %v515, 0.0004427343
          %v517 = vsel %vm516, %v514, %v511
          %v518 = vadd.f32 %v472, 1.0
          %v519 = vlog2.pop %v518
          %v520 = vmul.f32 %v519, 0.6931472
          %v521 = vmul.f32 -0.5, %v472
          %v522 = vadd.f32 %v521, 1.0
          %v523 = vmul.f32 %v522, %v472
          %v524 = vand.u32 2147483647, %v472
          %vm525 = vcmp.lt.f32.partialorder %v524, 0.0004427343
          %v526 = vsel %vm525, %v523, %v520
          %v527 = vadd.f32 %v474, 1.0
          %v528 = vlog2.pop %v527
          %v529 = vmul.f32 %v528, 0.6931472
          %v530 = vmul.f32 -0.5, %v474
          %v531 = vadd.f32 %v530, 1.0
          %v532 = vmul.f32 %v531, %v474
          %v533 = vand.u32 2147483647, %v474
          %vm534 = vcmp.lt.f32.partialorder %v533, 0.0004427343
          %v535 = vsel %vm534, %v532, %v529
          %v536 = vadd.f32 %v476, 1.0
          %v537 = vlog2.pop %v536
          %v538 = vmul.f32 %v537, 0.6931472
          %v539 = vmul.f32 -0.5, %v476
          %v540 = vadd.f32 %v539, 1.0
          %v541 = vmul.f32 %v540, %v476
          %v542 = vand.u32 2147483647, %v476
          %vm543 = vcmp.lt.f32.partialorder %v542, 0.0004427343
          %v544 = vsel %vm543, %v541, %v538
          %v545 = vadd.f32 %v505, %v517
          %v546 = vadd.f32 %v506, %v526
          %v547 = vadd.f32 %v507, %v535
          %v548 = vadd.f32 %v508, %v544
          %vm549 = vcmp.ge.f32.partialorder %v453, 0.0
          %vm550 = vcmp.ge.f32.partialorder %v454, 0.0
          %vm551 = vcmp.ge.f32.partialorder %v455, 0.0
          %vm552 = vcmp.ge.f32.partialorder %v456, 0.0
          %v553 = vmul.f32 %v470, %v493
          %v554 = vmul.f32 %v472, %v494
          %v555 = vmul.f32 %v474, %v495
          %v556 = vmul.f32 %v476, %v496
          %v557 = vsel %vm549, %v493, %v553
          %v558 = vsel %vm550, %v494, %v554
          %v559 = vsel %vm551, %v495, %v555
          %v560 = vsel %vm552, %v496, %v556
          %v561 = vmul.f32 %v557, 2.0
          %v562 = vmul.f32 %v558, 2.0
          %v563 = vmul.f32 %v559, 2.0
          %v564 = vmul.f32 %v560, 2.0
          %v565 = vsub.f32 1.0, %v561
          %v566 = vsub.f32 1.0, %v562
          %v567 = vsub.f32 1.0, %v563
          %v568 = vsub.f32 1.0, %v564
          %v569 = vmul.f32 %v457, %v565
          %v570 = vmul.f32 %v458, %v566
          %v571 = vmul.f32 %v459, %v567
          %v572 = vmul.f32 %v460, %v568
          %v573 = vadd.f32 %v557, %v569
          %v574 = vadd.f32 %v558, %v570
          %v575 = vadd.f32 %v559, %v571
          %v576 = vadd.f32 %v560, %v572
          %v577 = vmul.f32 %v457, -0.5
          %v578 = vmul.f32 %v458, -0.5
          %v579 = vmul.f32 %v459, -0.5
          %v580 = vmul.f32 %v460, -0.5
          %v581 = vadd.f32 %v577, 0.75
          %v582 = vadd.f32 %v578, 0.75
          %v583 = vadd.f32 %v579, 0.75
          %v584 = vadd.f32 %v580, 0.75
          %v585 = vrsqrt.pop %v573
          %v586 = vmul.f32 %v573, %v585
          %vm587 = vcmp.eq.f32.partialorder %v573, inf
          %v588 = vsel %vm587, %v573, %v586
          %vm589 = vcmp.eq.f32.partialorder %v573, 0.0
          %v590 = vand.u32 %v573, 2147483648
          %v591 = vsel %vm589, %v590, %v588
          %v592 = vrsqrt.pop %v574
          %v593 = vmul.f32 %v574, %v592
          %vm594 = vcmp.eq.f32.partialorder %v574, inf
          %v595 = vsel %vm594, %v574, %v593
          %vm596 = vcmp.eq.f32.partialorder %v574, 0.0
          %v597 = vand.u32 %v574, 2147483648
          %v598 = vsel %vm596, %v597, %v595
          %v599 = vrsqrt.pop %v575
          %v600 = vmul.f32 %v575, %v599
          %vm601 = vcmp.eq.f32.partialorder %v575, inf
          %v602 = vsel %vm601, %v575, %v600
          %vm603 = vcmp.eq.f32.partialorder %v575, 0.0
          %v604 = vand.u32 %v575, 2147483648
          %v605 = vsel %vm603, %v604, %v602
          %v606 = vrsqrt.pop %v576
          %v607 = vmul.f32 %v576, %v606
          %vm608 = vcmp.eq.f32.partialorder %v576, inf
          %v609 = vsel %vm608, %v576, %v607
          %vm610 = vcmp.eq.f32.partialorder %v576, 0.0
          %v611 = vand.u32 %v576, 2147483648
          %v612 = vsel %vm610, %v611, %v609
          %v613 = vmul.f32 %v573, %v591
          %v614 = vmul.f32 %v574, %v598
          %v615 = vmul.f32 %v575, %v605
          %v616 = vmul.f32 %v576, %v612
          %v617 = vmul.f32 %v545, %v581
          %v618 = vmul.f32 %v546, %v582
          %v619 = vmul.f32 %v547, %v583
          %v620 = vmul.f32 %v548, %v584
          %v621 = vmul.f32 %v617, %v613
          %v622 = vmul.f32 %v618, %v614
          %v623 = vmul.f32 %v619, %v615
          %v624 = vmul.f32 %v620, %v616
          %v625 = vsel %vm449, %v621, 0.0
          %v626 = vsel %vm450, %v622, 0.0
          %v627 = vsel %vm451, %v623, 0.0
          %v628 = vsel %vm452, %v624, 0.0
          %v629 = vld [vmem:[%s239] sm:$0xff]
          %v630 = vadd.f32 %v625, %v626
          %v631 = vadd.f32 %v630, %v627
          %v632 = vadd.f32 %v631, %v628
          %v633 = vadd.f32 %v629, %v632
          %634 = vst [vmem:[%s239] sm:$0xff] %v633
        $region48: #{tpu_custom_call.1} parent=27 // pred_fallthru
          _
        %s635 = sand.u32 %s106, 1
        %s636 = scalar_lea.sflag [#allocation4], %s635
        %s637 = sand.u32 %s106, 1
        %s638 = smul.addr %s637, 8
        %s639 = scalar_lea.vmem [#allocation7], %s638
        // Predicated region
        $region49: #{tpu_custom_call.1} parent=27 // pred_check
          %p640 = pneg %p116
        $region50: #{tpu_custom_call.1} parent=27 // pred_check_branch
          %642 = sbr.rel (%p640) target = $region52
        $region51: #{tpu_custom_call.1} parent=27 // pred_region
          %s644 = ssub.s32 128, 128
          %645 = vsyncadd %s636, %s644
          %s646 = smul.addr %s26, 128
          %s647 = scalar_lea.hbm %s2, %s646
          %s649 = sshll.u32 %s639, 4
          %s650 = int_to_ptr.vmem [resolvable:$true] %s649
          %652 = dma.vmem_to_hbm [thread:$0]  %s650, 128, %s647, %s636
        $region52: #{tpu_custom_call.1} parent=27 // pred_fallthru
          _
      $region28: #{tpu_custom_call.1} parent=5 // pred_fallthru
        _
      %p653 = scmp.le.s32.totalorder 2, %s17
      // Predicated region
      $region53: #{tpu_custom_call.1} parent=5 // pred_check
        %p654 = pneg %p653
      $region54: #{tpu_custom_call.1} parent=5 // pred_check_branch
        %656 = sbr.rel (%p654) target = $region56
      $region55: #{tpu_custom_call.1} parent=5 // pred_region
        %s657 = ssub.s32 %s17, 2
        // Predicated region
        $region57: #{tpu_custom_call.1} parent=55 // pred_check
          %p658 = pneg %p122
        $region58: #{tpu_custom_call.1} parent=55 // pred_check_branch
          %660 = sbr.rel (%p658) target = $region60
        $region59: #{tpu_custom_call.1} parent=55 // pred_region
          %s661 = sand.u32 %s107, 1
          %s662 = scalar_lea.sflag [#allocation4], %s661
          %s663 = sand.u32 %s107, 1
          %s664 = smul.addr %s663, 8
          %s665 = scalar_lea.vmem [#allocation7], %s664
          %666 = dma.done %s662, 128
        $region60: #{tpu_custom_call.1} parent=55 // pred_fallthru
          _
      $region56: #{tpu_custom_call.1} parent=5 // pred_fallthru
        _
    $region6: #{tpu_custom_call.1} parent=1 // loop_footer
      %s21 = sadd.s32 1, %s17
    $region7: #{tpu_custom_call.1} parent=1 // loop_footer_branch
      %16 = sbr.rel target = $region3
    $region8: #{tpu_custom_call.1} parent=1 // loop_exit
      _
    %667 = vsyncpa [#allocation3], 1
    %s668 = scalar_lea.sflag [#allocation3], 1
    %669 = vsyncpa %s668, 1
    %670 = vsyncpa [#allocation6], 1
    %s671 = scalar_lea.sflag [#allocation6], 1
    %672 = vsyncpa %s671, 1
    %673 = vsyncpa [#allocation4], 1
    %s674 = scalar_lea.sflag [#allocation4], 1
    %675 = vsyncpa %s674, 1

</llo_original>
